<compile_context>
chip_gen: v7x
topology: tpu7x:2x2x1
jax: 0.10.0
libtpu: 0.0.40
codegen_flags: <defaults>
</compile_context>

<pallas_src>
import functools

import numpy as np
import jax
import jax.numpy as jnp
from jax import lax
from jax.experimental import pallas as pl
from jax.experimental.pallas import tpu as pltpu


@functools.lru_cache(maxsize=None)
def _vmem_limit_bytes():
    """Generation-aware scoped-VMEM limit (~75% of physical VMEM)."""
    cap = 64 << 20  # conservative fallback (v7x-sized)
    try:
        cap = int(getattr(pltpu.get_tpu_info(), "vmem_capacity_bytes", cap))
    except Exception:
        pass
    return int(min(cap * 3 // 4, 100 << 20))


def _params(semantics):
    return pltpu.CompilerParams(dimension_semantics=semantics,
                                vmem_limit_bytes=_vmem_limit_bytes())


def _choose_block_rows(n, hp, itemsize, requested=None):
    """Node-axis tile: ~vmem_limit/14 bytes of x per buffer (clamped to 2-8 MiB),
    sized from the actual dtype, rows a multiple of 128 (gid rows ride the lane
    axis).  The f32 temporaries of the fused normalize pass bound the top end."""
    if requested is None:
        target = max(2 << 20, min(8 << 20, _vmem_limit_bytes() // 14))
        tn = target // max(itemsize * hp, 1)
        tn = min(tn, (8 << 20) // max(4 * hp, 1))   # cap per-temp f32 working set
    else:
        tn = int(requested)
    if tn >= n:
        return n
    return max(128, (tn // 128) * 128)


# ------------------------------ graphnorm kernels ------------------------------
def _graphnorm_stats_kernel(gidr_ref, x_ref, ms_ref, w_ref, b_ref, invc_ref,
                            ss_ref, *, num_graphs, num_nodes, block_n, hidden):
    t = pl.program_id(0)

    @pl.when(t == 0)
    def _init():
        ss_ref[...] = jnp.zeros_like(ss_ref)

    x = x_ref[...]                                         # (TN, H) native dtype
    if num_nodes % block_n != 0:                           # zero stale pad rows only
        row = t * block_n + lax.broadcasted_iota(jnp.int32, (block_n, 1), 0)
        x = jnp.where(row < num_nodes, x, jnp.zeros_like(x))

    gid = gidr_ref[...]                                    # (1, TN) int32
    g_iota = lax.broadcasted_iota(jnp.int32, (num_graphs, block_n), 0)
    onehot = (g_iota == gid).astype(x.dtype)               # exact 0/1, MXU-native dtype

    # Fused E[x] / E[x^2] accumulation: one MXU contraction over the node tile.
    xx = jnp.concatenate([x, x * x], axis=-1)              # (TN, 2H)
    ss_ref[...] += jnp.dot(onehot, xx, preferred_element_type=jnp.float32)

    @pl.when(t == pl.num_programs(0) - 1)
    def _finalize():
        invc = invc_ref[...]                               # (B, 1) = 1 / count
        sums = ss_ref[...]                                 # (B, 2H) [sum x | sum x^2]
        mean = sums[:, :hidden] * invc                     # E[x]
        ex2 = sums[:, hidden:] * invc                      # E[x^2]
        ms = ms_ref[...]                                   # (1, H)
        # var of (x - mean*ms) per graph = E[x^2] - mean^2*ms*(2-ms)  (exact;
        # f32 accumulation; cancellation only if |mean| >> std).
        var = ex2 - mean * mean * ms * (2.0 - ms)
        rstd = lax.rsqrt(var + 1e-6)                       # eps inside sqrt (module)
        scale = w_ref[...] * rstd                          # (B, H)
        shift = b_ref[...] - mean * ms * scale             # (B, H)
        ss_ref[...] = jnp.concatenate([scale, shift], axis=-1)   # fused [scale|shift]


def _graphnorm_norm_kernel(gidc_ref, x_ref, ss_ref, o_ref, *, num_graphs,
                           block_n, hidden):
    gid = gidc_ref[...]                                    # (TN, 1) int32
    g_iota = lax.broadcasted_iota(jnp.int32, (block_n, num_graphs), 1)
    onehot = (g_iota == gid).astype(jnp.float32)           # (TN, B) -- no transposes
    gathered = jnp.dot(onehot, ss_ref[...],
                       preferred_element_type=jnp.float32)  # (TN, 2H) [scale|shift]
    x = x_ref[...].astype(jnp.float32)
    o_ref[...] = (x * gathered[:, :hidden] + gathered[:, hidden:]).astype(o_ref.dtype)


# ------------------------------ layernorm kernel -------------------------------
def _layernorm_kernel(x_ref, w_ref, b_ref, o_ref):
    x = x_ref[...].astype(jnp.float32)
    mu = jnp.mean(x, axis=-1, keepdims=True)
    d = x - mu
    var = jnp.mean(d * d, axis=-1, keepdims=True)
    o_ref[...] = (d * lax.rsqrt(var + 1e-5) * w_ref[...] + b_ref[...]).astype(o_ref.dtype)


# ------------------------------ batchnorm kernels ------------------------------
def _batchnorm_stats_kernel(x_ref, w_ref, b_ref, ss_ref, *, num_nodes, block_n, hidden):
    t = pl.program_id(0)

    @pl.when(t == 0)
    def _init():
        ss_ref[...] = jnp.zeros_like(ss_ref)

    x = x_ref[...].astype(jnp.float32)
    if num_nodes % block_n != 0:                           # zero stale pad rows
        row = t * block_n + lax.broadcasted_iota(jnp.int32, (block_n, 1), 0)
        x = jnp.where(row < num_nodes, x, 0.0)
    ss_ref[...] += jnp.concatenate(
        [jnp.sum(x, axis=0, keepdims=True), jnp.sum(x * x, axis=0, keepdims=True)],
        axis=-1)                                           # (1, 2H) running sums

    @pl.when(t == pl.num_programs(0) - 1)
    def _finalize():
        inv_n = 1.0 / float(num_nodes)
        sums = ss_ref[...]
        mean = sums[:, :hidden] * inv_n
        var = sums[:, hidden:] * inv_n - mean * mean       # biased var (training)
        rstd = lax.rsqrt(var + 1e-5)
        scale = w_ref[...] * rstd
        shift = b_ref[...] - mean * scale
        ss_ref[...] = jnp.concatenate([scale, shift], axis=-1)


def _batchnorm_norm_kernel(x_ref, ss_ref, o_ref, *, hidden):
    x = x_ref[...].astype(jnp.float32)
    ss = ss_ref[...]
    o_ref[...] = (x * ss[:, :hidden] + ss[:, hidden:]).astype(o_ref.dtype)


# ------------------------------- graph metadata --------------------------------
def prepare_graph(batch_num_nodes):
    """Build per-batch graph metadata once (host side) and reuse across calls."""
    counts = np.asarray(batch_num_nodes, dtype=np.int64)
    num_graphs = int(counts.shape[0])
    num_nodes = int(counts.sum())
    safe = np.maximum(counts, 1)                 # guard empty graphs (no 1/0 NaNs)
    gid = np.repeat(np.arange(num_graphs, dtype=np.int32), counts)
    return {
        "batch_num_nodes": [int(c) for c in counts],
        "num_graphs": num_graphs,
        "num_nodes": num_nodes,
        "gid_row": jnp.asarray(gid).reshape(1, num_nodes),
        "gid_col": jnp.asarray(gid).reshape(num_nodes, 1),
        "inv_count": jnp.asarray((1.0 / safe).astype(np.float32)).reshape(num_graphs, 1),
    }


# -------------------------------- python wrapper --------------------------------
class NormLayer:
    """JAX/Pallas port of graphmae.utils.NormLayer (forward only)."""

    def __init__(self, hidden_dim, norm_type):
        self.hidden_dim = hidden_dim
        self.norm_type = norm_type
        if norm_type not in ("batchnorm", "layernorm", "graphnorm"):
            raise NotImplementedError(norm_type)
        self.weight = jnp.ones((hidden_dim,), jnp.float32)
        self.bias = jnp.zeros((hidden_dim,), jnp.float32)
        if norm_type == "graphnorm":
            self.mean_scale = jnp.ones((hidden_dim,), jnp.float32)

    def __call__(self, graph, x, block_rows=None):
        N, H = x.shape
        assert H == self.hidden_dim

        # Lane-dense layout: pad the feature axis to a multiple of 128 so output
        # stores are unmasked vst; padded columns are sliced off afterwards.
        pad_h = self.norm_type != "layernorm" and H % 128 != 0
        # TODO(synk): layernorm keeps native H (masked stores) -- zero-padding H
        # would change its per-row statistics without extra masking.
        hp = ((H + 127) // 128) * 128 if pad_h else H

        def padH(a):
            return jnp.pad(a, ((0, 0), (0, hp - H))) if pad_h else a

        x_in = padH(x)
        w = padH(self.weight.reshape(1, H).astype(jnp.float32))
        b = padH(self.bias.reshape(1, H).astype(jnp.float32))

        tn = _choose_block_rows(N, hp, x.dtype.itemsize, block_rows)
        nt = pl.cdiv(N, tn)

        row_spec = pl.BlockSpec((tn, hp), lambda i: (i, 0))   # x / out node tiles
        par_spec = pl.BlockSpec((1, hp), lambda i: (0, 0))    # pinned (1, H) params

        if self.norm_type == "layernorm":
            return pl.pallas_call(
                _layernorm_kernel,
                grid=(nt,),
                in_specs=[row_spec, par_spec, par_spec],
                out_specs=row_spec,
                out_shape=jax.ShapeDtypeStruct((N, hp), x.dtype),
                compiler_params=_params(("parallel",)),
            )(x_in, w, b)

        ss1_spec = pl.BlockSpec((1, 2 * hp), lambda i: (0, 0))

        if self.norm_type == "batchnorm":
            # TODO(synk): running-mean/var buffer update (eval mode) not reproduced.
            scale_shift = pl.pallas_call(
                functools.partial(_batchnorm_stats_kernel,
                                  num_nodes=N, block_n=tn, hidden=hp),
                grid=(nt,),
                in_specs=[row_spec, par_spec, par_spec],
                out_specs=ss1_spec,
                out_shape=jax.ShapeDtypeStruct((1, 2 * hp), jnp.float32),
                compiler_params=_params(("arbitrary",)),
            )(x_in, w, b)
            out = pl.pallas_call(
                functools.partial(_batchnorm_norm_kernel, hidden=hp),
                grid=(nt,),
                in_specs=[row_spec, ss1_spec],
                out_specs=row_spec,
                out_shape=jax.ShapeDtypeStruct((N, hp), x.dtype),
                compiler_params=_params(("parallel",)),
            )(x_in, scale_shift)
            return out[:, :H] if pad_h else out

        # ------------------------------ graphnorm ------------------------------
        meta = graph if isinstance(graph, dict) and "gid_row" in graph \
            else prepare_graph(graph["batch_num_nodes"])
        B = meta["num_graphs"]
        assert meta["num_nodes"] == N
        gid_row, gid_col, invc = meta["gid_row"], meta["gid_col"], meta["inv_count"]
        ms = padH(self.mean_scale.reshape(1, H).astype(jnp.float32))

        gidr_spec = pl.BlockSpec((1, tn), lambda i: (0, i))
        gidc_spec = pl.BlockSpec((tn, 1), lambda i: (i, 0))
        invc_spec = pl.BlockSpec((B, 1), lambda i: (0, 0))
        ss_spec = pl.BlockSpec((B, 2 * hp), lambda i: (0, 0))   # resident accumulator

        # TODO(synk): v7x dual-TensorCore stats split (parallel partial sums) not implemented.
        scale_shift = pl.pallas_call(
            functools.partial(_graphnorm_stats_kernel,
                              num_graphs=B, num_nodes=N, block_n=tn, hidden=hp),
            grid=(nt,),
            in_specs=[gidr_spec, row_spec, par_spec, par_spec, par_spec, invc_spec],
            out_specs=ss_spec,
            out_shape=jax.ShapeDtypeStruct((B, 2 * hp), jnp.float32),
            compiler_params=_params(("arbitrary",)),
        )(gid_row, x_in, ms, w, b, invc)

        out = pl.pallas_call(
            functools.partial(_graphnorm_norm_kernel,
                              num_graphs=B, block_n=tn, hidden=hp),
            grid=(nt,),
            in_specs=[gidc_spec, row_spec, ss_spec],
            out_specs=row_spec,
            out_shape=jax.ShapeDtypeStruct((N, hp), x.dtype),
            compiler_params=_params(("parallel",)),
        )(gid_col, x_in, scale_shift)
        return out[:, :H] if pad_h else out


# ------------------------------- numpy references -------------------------------
def _graphnorm_ref(x, counts, w, b, ms):
    x = np.asarray(x, np.float64)
    counts = np.asarray(counts)
    seg = np.repeat(np.arange(len(counts)), counts)
    Bn, H = len(counts), x.shape[1]
    mean = np.zeros((Bn, H))
    np.add.at(mean, seg, x)
    mean = mean / counts[:, None]
    sub = x - mean[seg] * np.asarray(ms, np.float64)
    var = np.zeros((Bn, H))
    np.add.at(var, seg, sub ** 2)
    std = np.sqrt(var / counts[:, None] + 1e-6)[seg]
    return np.asarray(w, np.float64) * sub / std + np.asarray(b, np.float64)


def _layernorm_ref(x, w, b):
    x = np.asarray(x, np.float64)
    mu = x.mean(-1, keepdims=True)
    var = x.var(-1, keepdims=True)
    return np.asarray(w, np.float64) * (x - mu) / np.sqrt(var + 1e-5) + np.asarray(b, np.float64)


def _batchnorm_ref(x, w, b):
    x = np.asarray(x, np.float64)
    mu = x.mean(0, keepdims=True)
    var = x.var(0, keepdims=True)
    return np.asarray(w, np.float64) * (x - mu) / np.sqrt(var + 1e-5) + np.asarray(b, np.float64)


if __name__ == "__main__":
    key = jax.random.PRNGKey(0)
    kx, kw, kb, km, kw2, kb2, kw3, kb3 = jax.random.split(key, 8)

    batch_num_nodes = [160, 200]          # N=360: graph boundary crosses a 128-row
    N, H = sum(batch_num_nodes), 128      # tile AND the last tile is ragged
    x = jax.random.normal(kx, (N, H), dtype=jnp.float32)

    graph = prepare_graph(batch_num_nodes)   # host metadata built once per batch

    # graphnorm (the module's custom forward); block_rows=128 forces multi-tile
    # pipelining and exercises the ragged-last-tile path.
    gn = NormLayer(H, "graphnorm")
    gn.weight = 1.0 + 0.5 * jax.random.normal(kw, (H,), jnp.float32)
    gn.bias = 0.1 * jax.random.normal(kb, (H,), jnp.float32)
    gn.mean_scale = 1.0 + 0.3 * jax.random.normal(km, (H,), jnp.float32)
    out = jax.block_until_ready(gn(graph, x, block_rows=128))
    ref = _graphnorm_ref(np.asarray(x), batch_num_nodes,
                         np.asarray(gn.weight), np.asarray(gn.bias),
                         np.asarray(gn.mean_scale))
    np.testing.assert_allclose(np.asarray(out), ref, rtol=5e-4, atol=5e-4)

    # same batch through the auto (generation-aware) tiling path
    out_auto = jax.block_until_ready(gn(graph, x))
    np.testing.assert_allclose(np.asarray(out_auto), ref, rtol=5e-4, atol=5e-4)

    ln = NormLayer(H, "layernorm")
    ln.weight = 1.0 + 0.5 * jax.random.normal(kw2, (H,), jnp.float32)
    ln.bias = 0.1 * jax.random.normal(kb2, (H,), jnp.float32)
    ln_out = jax.block_until_ready(ln(graph, x, block_rows=128))
    np.testing.assert_allclose(
        np.asarray(ln_out),
        _layernorm_ref(np.asarray(x), np.asarray(ln.weight), np.asarray(ln.bias)),
        rtol=5e-4, atol=5e-4)

    bn = NormLayer(H, "batchnorm")
    bn.weight = 1.0 + 0.5 * jax.random.normal(kw3, (H,), jnp.float32)
    bn.bias = 0.1 * jax.random.normal(kb3, (H,), jnp.float32)
    bn_out = jax.block_until_ready(bn(graph, x, block_rows=128))
    np.testing.assert_allclose(
        np.asarray(bn_out),
        _batchnorm_ref(np.asarray(x), np.asarray(bn.weight), np.asarray(bn.bias)),
        rtol=5e-4, atol=5e-4)

    print("KERNEL_OK")
</pallas_src>

<mosaic_0001>
module attributes {stable_mosaic.version = 11 : i64} {
  func.func @_graphnorm_stats_kernel(%arg0: i32, %arg1: memref<1x128xi32, #tpu.memory_space<vmem>>, %arg2: memref<128x128xf32, #tpu.memory_space<vmem>>, %arg3: memref<1x128xf32, #tpu.memory_space<vmem>>, %arg4: memref<1x128xf32, #tpu.memory_space<vmem>>, %arg5: memref<1x128xf32, #tpu.memory_space<vmem>>, %arg6: memref<2x1xf32, #tpu.memory_space<vmem>>, %arg7: memref<2x256xf32, #tpu.memory_space<vmem>>) attributes {dimension_semantics = [#tpu.dimension_semantics<arbitrary>], iteration_bounds = array<i64: 3>, scalar_prefetch = 0 : i64, scratch_operands = 0 : i64, tpu.core_type = #tpu.core_type<tc>, window_params = [{transform_indices = @transform_0, window_bounds = array<i64: 1, 128>}, {transform_indices = @transform_1, window_bounds = array<i64: 128, 128>}, {pipeline_mode = #tpu.pipeline_mode<synchronous>, transform_indices = @transform_2, window_bounds = array<i64: 1, 128>}, {pipeline_mode = #tpu.pipeline_mode<synchronous>, transform_indices = @transform_3, window_bounds = array<i64: 1, 128>}, {pipeline_mode = #tpu.pipeline_mode<synchronous>, transform_indices = @transform_4, window_bounds = array<i64: 1, 128>}, {pipeline_mode = #tpu.pipeline_mode<synchronous>, transform_indices = @transform_5, window_bounds = array<i64: 2, 1>}, {pipeline_mode = #tpu.pipeline_mode<synchronous>, transform_indices = @transform_6, window_bounds = array<i64: 2, 256>}]} {
    %c0_i32 = arith.constant 0 : i32
    %0 = arith.cmpi eq, %arg0, %c0_i32 : i32
    %1 = arith.extui %0 : i1 to i32
    %c0_i32_0 = arith.constant 0 : i32
    %2 = arith.cmpi ne, %1, %c0_i32_0 : i32
    scf.if %2 {
      %cst_10 = arith.constant 0.000000e+00 : f32
      %29 = vector.broadcast %cst_10 : f32 to vector<2x256xf32>
      %c0_11 = arith.constant 0 : index
      %c0_12 = arith.constant 0 : index
      %30 = vector.load %arg7[%c0_11, %c0_12] : memref<2x256xf32, #tpu.memory_space<vmem>>, vector<2x256xf32>
      tpu.vector_store %arg7[%c0_11, %c0_12], %29 {strides = array<i32>} : memref<2x256xf32, #tpu.memory_space<vmem>>, vector<2x256xf32>,
    } else {
    }
    %c0 = arith.constant 0 : index
    %c0_1 = arith.constant 0 : index
    %3 = vector.load %arg2[%c0, %c0_1] : memref<128x128xf32, #tpu.memory_space<vmem>>, vector<128x128xf32>
    %c128_i32 = arith.constant 128 : i32
    %4 = arith.muli %arg0, %c128_i32 : i32
    %5 = tpu.iota {dimensions = array<i32: 0>} : vector<128x1xi32>
    %6 = vector.broadcast %4 : i32 to vector<128x1xi32>
    %7 = arith.addi %6, %5 : vector<128x1xi32>
    %c360_i32 = arith.constant 360 : i32
    %8 = vector.broadcast %c360_i32 : i32 to vector<128x1xi32>
    %9 = arith.cmpi slt, %7, %8 : vector<128x1xi32>
    %cst = arith.constant 0.000000e+00 : f32
    %10 = vector.broadcast %cst : f32 to vector<128x128xf32>
    %11 = vector.shape_cast %9 : vector<128x1xi1> to vector<128x1xi1>
    %12 = vector.broadcast %11 : vector<128x1xi1> to vector<128x128xi1>
    %13 = arith.select %12, %3, %10 : vector<128x128xi1>, vector<128x128xf32>
    %c0_2 = arith.constant 0 : index
    %c0_3 = arith.constant 0 : index
    %14 = vector.load %arg1[%c0_2, %c0_3] : memref<1x128xi32, #tpu.memory_space<vmem>>, vector<1x128xi32>
    %15 = tpu.iota {dimensions = array<i32: 0>} : vector<2x128xi32>
    %16 = vector.broadcast %14 : vector<1x128xi32> to vector<2x128xi32>
    %17 = arith.cmpi eq, %15, %16 : vector<2x128xi32>
    %18 = arith.extui %17 : vector<2x128xi1> to vector<2x128xi32>
    %19 = arith.sitofp %18 : vector<2x128xi32> to vector<2x128xf32>
    %20 = arith.mulf %13, %13 : vector<128x128xf32>
    %21 = tpu.concatenate %13, %20 in 1 : vector<128x128xf32>, vector<128x128xf32> -> vector<128x256xf32>
    %c0_4 = arith.constant 0 : index
    %c0_5 = arith.constant 0 : index
    %22 = vector.load %arg7[%c0_4, %c0_5] : memref<2x256xf32, #tpu.memory_space<vmem>>, vector<2x256xf32>
    %cst_6 = arith.constant dense<0.000000e+00> : vector<2x256xf32>
    %23 = tpu.matmul %19, %21, %cst_6 {dimension_numbers = #tpu.dot_dimension_numbers<[1], [0], [0], [1], [0, 0, 1, 1], [], []>} : vector<2x128xf32>, vector<128x256xf32>, vector<2x256xf32> -> vector<2x256xf32>
    %24 = arith.addf %22, %23 : vector<2x256xf32>
    %c0_7 = arith.constant 0 : index
    %c0_8 = arith.constant 0 : index
    %25 = vector.load %arg7[%c0_7, %c0_8] : memref<2x256xf32, #tpu.memory_space<vmem>>, vector<2x256xf32>
    tpu.vector_store %arg7[%c0_7, %c0_8], %24 {strides = array<i32>} : memref<2x256xf32, #tpu.memory_space<vmem>>, vector<2x256xf32>,
    %c2_i32 = arith.constant 2 : i32
    %26 = arith.cmpi eq, %arg0, %c2_i32 : i32
    %27 = arith.extui %26 : i1 to i32
    %c0_i32_9 = arith.constant 0 : i32
    %28 = arith.cmpi ne, %27, %c0_i32_9 : i32
    scf.if %28 {
      %c0_10 = arith.constant 0 : index
      %c0_11 = arith.constant 0 : index
      %29 = vector.load %arg6[%c0_10, %c0_11] : memref<2x1xf32, #tpu.memory_space<vmem>>, vector<2x1xf32>
      %c0_12 = arith.constant 0 : index
      %c0_13 = arith.constant 0 : index
      %30 = vector.load %arg7[%c0_12, %c0_13] : memref<2x256xf32, #tpu.memory_space<vmem>>, vector<2x256xf32>
      %31 = vector.extract_strided_slice %30 {offsets = [0, 0], sizes = [2, 128], strides = [1, 1]} : vector<2x256xf32> to vector<2x128xf32>
      %32 = vector.broadcast %29 : vector<2x1xf32> to vector<2x128xf32>
      %33 = arith.mulf %31, %32 : vector<2x128xf32>
      %34 = vector.extract_strided_slice %30 {offsets = [0, 128], sizes = [2, 128], strides = [1, 1]} : vector<2x256xf32> to vector<2x128xf32>
      %35 = vector.broadcast %29 : vector<2x1xf32> to vector<2x128xf32>
      %36 = arith.mulf %34, %35 : vector<2x128xf32>
      %c0_14 = arith.constant 0 : index
      %c0_15 = arith.constant 0 : index
      %37 = vector.load %arg3[%c0_14, %c0_15] : memref<1x128xf32, #tpu.memory_space<vmem>>, vector<1x128xf32>
      %38 = arith.mulf %33, %33 : vector<2x128xf32>
      %39 = vector.broadcast %37 : vector<1x128xf32> to vector<2x128xf32>
      %40 = arith.mulf %38, %39 : vector<2x128xf32>
      %cst_16 = arith.constant 2.000000e+00 : f32
      %41 = vector.broadcast %cst_16 : f32 to vector<1x128xf32>
      %42 = arith.subf %41, %37 : vector<1x128xf32>
      %43 = vector.broadcast %42 : vector<1x128xf32> to vector<2x128xf32>
      %44 = arith.mulf %40, %43 : vector<2x128xf32>
      %45 = arith.subf %36, %44 : vector<2x128xf32>
      %cst_17 = arith.constant 9.99999997E-7 : f32
      %46 = vector.broadcast %cst_17 : f32 to vector<2x128xf32>
      %47 = arith.addf %45, %46 : vector<2x128xf32>
      %48 = math.rsqrt %47 : vector<2x128xf32>
      %c0_18 = arith.constant 0 : index
      %c0_19 = arith.constant 0 : index
      %49 = vector.load %arg4[%c0_18, %c0_19] : memref<1x128xf32, #tpu.memory_space<vmem>>, vector<1x128xf32>
      %50 = vector.broadcast %49 : vector<1x128xf32> to vector<2x128xf32>
      %51 = arith.mulf %50, %48 : vector<2x128xf32>
      %c0_20 = arith.constant 0 : index
      %c0_21 = arith.constant 0 : index
      %52 = vector.load %arg5[%c0_20, %c0_21] : memref<1x128xf32, #tpu.memory_space<vmem>>, vector<1x128xf32>
      %53 = vector.broadcast %37 : vector<1x128xf32> to vector<2x128xf32>
      %54 = arith.mulf %33, %53 : vector<2x128xf32>
      %55 = arith.mulf %54, %51 : vector<2x128xf32>
      %56 = vector.broadcast %52 : vector<1x128xf32> to vector<2x128xf32>
      %57 = arith.subf %56, %55 : vector<2x128xf32>
      %58 = tpu.concatenate %51, %57 in 1 : vector<2x128xf32>, vector<2x128xf32> -> vector<2x256xf32>
      %c0_22 = arith.constant 0 : index
      %c0_23 = arith.constant 0 : index
      %59 = vector.load %arg7[%c0_22, %c0_23] : memref<2x256xf32, #tpu.memory_space<vmem>>, vector<2x256xf32>
      tpu.vector_store %arg7[%c0_22, %c0_23], %58 {strides = array<i32>} : memref<2x256xf32, #tpu.memory_space<vmem>>, vector<2x256xf32>,
    } else {
    }
    return
  }
  func.func @transform_0(%arg0: i32) -> (i32, i32) {
    %c0_i32 = arith.constant 0 : i32
    %c0_i32_0 = arith.constant 0 : i32
    return %c0_i32, %arg0 : i32, i32
  }
  func.func @transform_1(%arg0: i32) -> (i32, i32) {
    %c0_i32 = arith.constant 0 : i32
    %c0_i32_0 = arith.constant 0 : i32
    return %arg0, %c0_i32 : i32, i32
  }
  func.func @transform_2(%arg0: i32) -> (i32, i32) {
    %c0_i32 = arith.constant 0 : i32
    %c0_i32_0 = arith.constant 0 : i32
    %c0_i32_1 = arith.constant 0 : i32
    return %c0_i32, %c0_i32_0 : i32, i32
  }
  func.func @transform_3(%arg0: i32) -> (i32, i32) {
    %c0_i32 = arith.constant 0 : i32
    %c0_i32_0 = arith.constant 0 : i32
    %c0_i32_1 = arith.constant 0 : i32
    return %c0_i32, %c0_i32_0 : i32, i32
  }
  func.func @transform_4(%arg0: i32) -> (i32, i32) {
    %c0_i32 = arith.constant 0 : i32
    %c0_i32_0 = arith.constant 0 : i32
    %c0_i32_1 = arith.constant 0 : i32
    return %c0_i32, %c0_i32_0 : i32, i32
  }
  func.func @transform_5(%arg0: i32) -> (i32, i32) {
    %c0_i32 = arith.constant 0 : i32
    %c0_i32_0 = arith.constant 0 : i32
    %c0_i32_1 = arith.constant 0 : i32
    return %c0_i32, %c0_i32_0 : i32, i32
  }
  func.func @transform_6(%arg0: i32) -> (i32, i32) {
    %c0_i32 = arith.constant 0 : i32
    %c0_i32_0 = arith.constant 0 : i32
    %c0_i32_1 = arith.constant 0 : i32
    return %c0_i32, %c0_i32_0 : i32, i32
  }
}

</mosaic_0001>

<llo_original>
// kernel: tpu_custom_call.1
$region0: #{tpu_custom_call.1}
  #allocation0 [shape = 'u32[]', space=smem, size = 0x4, offset = 0x4, fixed_abs, tag = 'smem constant byte address 0x4 - core index']
  #allocation1 [shape = 'u32[144,128]{1,0:T(1,128)}', space=vmem, size = 0x12000, scoped, tag = 'internal scratch']
  %s0 = inlined_call_operand.vmem [shape: s32[1,360], index: 0, kind: input, shape index: {}]
  %s1 = inlined_call_operand.hbm [shape: f32[360,128], index: 1, kind: input, shape index: {}]
  %s2 = inlined_call_operand.vmem [shape: f32[1,128], index: 2, kind: input, shape index: {}]
  %s3 = inlined_call_operand.vmem [shape: f32[1,128], index: 3, kind: input, shape index: {}]
  %s4 = inlined_call_operand.vmem [shape: f32[1,128], index: 4, kind: input, shape index: {}]
  %s5 = inlined_call_operand.vmem [shape: f32[2,1], index: 5, kind: input, shape index: {}]
  %s6 = inlined_call_operand.hbm [shape: f32[2,256], index: 6, kind: output, shape index: {}]
  %s7 = sld [smem:[#allocation0]]
  $region69: #{tpu_custom_call.1} parent=0
    _
  %s9 = ssub.s32 1, %s7
  %s10 = scalar_select 0, %s9, %s7
  $region1: #{tpu_custom_call.1} parent=0
    #allocation2 [shape = 'u8[131072]{0}', space=vmem, size = 0x20000, scoped, tag = 'input window, operand 1']
    #allocation3 [shape = 's32[2]{0}', space=sflag, size = 0x8, scoped, tag = 'scoped memory for tpu_custom_call.1']
    #allocation4 [shape = 's32[2]{0}', space=sflag, size = 0x8, scoped, tag = 'scoped memory for tpu_custom_call.1']
    #allocation5 [shape = 'u8[2048]{0}', space=vmem, size = 0x800, scoped, tag = 'output window, operand 0, single buffered']
    %11 = vsyncpa [#allocation3], 0
    %s12 = scalar_lea.sflag [#allocation3], 1
    %13 = vsyncpa %s12, 0
    %14 = vsyncpa [#allocation4], 0
    loop: start=0, step=1, limit=5
    $region2: #{tpu_custom_call.1} parent=1 // loop_pre_header
      _
    $region3: #{tpu_custom_call.1} parent=1 // loop_header
      %s16 = sphi 0, %s20
      %p17 = scmp.ge.s32.totalorder %s16, 5
      %s26 = sphi 0, %s28
      %s29 = sphi 0, %s26
      %s30 = sphi 0, %s29
      %s46 = sphi 0, %s30
      %s52 = sphi 0, %s54
      %s55 = sphi 0, %s52
      %s56 = sphi 0, %s55
      %s72 = sphi 0, %s56
      %s76 = sphi 0, %s76
      %s78 = sphi 0, %s76
      %s79 = sphi 0, %s78
      %s93 = sphi 0, %s79
      %s97 = sphi 0, %s97
      %s99 = sphi 0, %s97
      %s100 = sphi 0, %s99
      %s114 = sphi 0, %s100
      %s118 = sphi 0, %s118
      %s120 = sphi 0, %s118
      %s121 = sphi 0, %s120
      %s135 = sphi 0, %s121
      %s139 = sphi 0, %s139
      %s141 = sphi 0, %s139
      %s142 = sphi 0, %s141
      %s156 = sphi 0, %s142
      %s160 = sphi 0, %s160
      %s162 = sphi 0, %s160
      %s163 = sphi 0, %s162
      %s177 = sphi 0, %s163
    $region4: #{tpu_custom_call.1} parent=1 // loop_header_branch
      %19 = sbr.rel (%p17) target = $region8
    $region5: #{tpu_custom_call.1} parent=1 // loop_body
      %s21 = ssub.s32 %s16, 1
      %s22 = ssub.s32 %s16, 2
      %s23 = sadd.s32 %s16, 1
      %s24 = ssub.s32 %s16, %s23
      %p25 = scmp.eq.s32.totalorder %s24, 0
      %s27 = sadd.s32 %s26, 1
      %s28 = scalar_select %p25, %s26, %s27
      %p31 = pneg %p25
      %p32 = scmp.eq.s32.totalorder %s16, 2
      %p33 = por %p31, %p32
      %p34 = scmp.ne.s32.totalorder %s26, %s29
      %p35 = scmp.eq.s32.totalorder %s16, 0
      %p36 = por %p34, %p35
      %p37 = scmp.ne.s32.totalorder %s26, %s29
      %p38 = scmp.eq.s32.totalorder %s21, 2
      %p39 = por %p37, %p38
      %p40 = scmp.ne.s32.totalorder %s29, %s30
      %p41 = scmp.eq.s32.totalorder %s21, 0
      %p42 = por %p40, %p41
      %p43 = scmp.ne.s32.totalorder %s29, %s30
      %p44 = scmp.eq.s32.totalorder %s22, 2
      %p45 = por %p43, %p44
      %p47 = scmp.ne.s32.totalorder %s30, %s46
      %p48 = scmp.eq.s32.totalorder %s22, 0
      %p49 = por %p47, %p48
      %s50 = ssub.s32 %s16, %s23
      %p51 = scmp.eq.s32.totalorder %s50, 0
      %s53 = sadd.s32 %s52, 1
      %s54 = scalar_select %p51, %s52, %s53
      %p57 = pneg %p51
      %p58 = scmp.eq.s32.totalorder %s16, 2
      %p59 = por %p57, %p58
      %p60 = scmp.ne.s32.totalorder %s52, %s55
      %p61 = scmp.eq.s32.totalorder %s16, 0
      %p62 = por %p60, %p61
      %p63 = scmp.ne.s32.totalorder %s52, %s55
      %p64 = scmp.eq.s32.totalorder %s21, 2
      %p65 = por %p63, %p64
      %p66 = scmp.ne.s32.totalorder %s55, %s56
      %p67 = scmp.eq.s32.totalorder %s21, 0
      %p68 = por %p66, %p67
      %p69 = scmp.ne.s32.totalorder %s55, %s56
      %p70 = scmp.eq.s32.totalorder %s22, 2
      %p71 = por %p69, %p70
      %p73 = scmp.ne.s32.totalorder %s56, %s72
      %p74 = scmp.eq.s32.totalorder %s22, 0
      %p75 = por %p73, %p74
      %s77 = sadd.s32 %s76, 1
      %p80 = scmp.eq.s32.totalorder %s16, 2
      %p81 = scmp.ne.s32.totalorder %s76, %s78
      %p82 = scmp.eq.s32.totalorder %s16, 0
      %p83 = por %p81, %p82
      %p84 = scmp.ne.s32.totalorder %s76, %s78
      %p85 = scmp.eq.s32.totalorder %s21, 2
      %p86 = por %p84, %p85
      %p87 = scmp.ne.s32.totalorder %s78, %s79
      %p88 = scmp.eq.s32.totalorder %s21, 0
      %p89 = por %p87, %p88
      %p90 = scmp.ne.s32.totalorder %s78, %s79
      %p91 = scmp.eq.s32.totalorder %s22, 2
      %p92 = por %p90, %p91
      %p94 = scmp.ne.s32.totalorder %s79, %s93
      %p95 = scmp.eq.s32.totalorder %s22, 0
      %p96 = por %p94, %p95
      %s98 = sadd.s32 %s97, 1
      %p101 = scmp.eq.s32.totalorder %s16, 2
      %p102 = scmp.ne.s32.totalorder %s97, %s99
      %p103 = scmp.eq.s32.totalorder %s16, 0
      %p104 = por %p102, %p103
      %p105 = scmp.ne.s32.totalorder %s97, %s99
      %p106 = scmp.eq.s32.totalorder %s21, 2
      %p107 = por %p105, %p106
      %p108 = scmp.ne.s32.totalorder %s99, %s100
      %p109 = scmp.eq.s32.totalorder %s21, 0
      %p110 = por %p108, %p109
      %p111 = scmp.ne.s32.totalorder %s99, %s100
      %p112 = scmp.eq.s32.totalorder %s22, 2
      %p113 = por %p111, %p112
      %p115 = scmp.ne.s32.totalorder %s100, %s114
      %p116 = scmp.eq.s32.totalorder %s22, 0
      %p117 = por %p115, %p116
      %s119 = sadd.s32 %s118, 1
      %p122 = scmp.eq.s32.totalorder %s16, 2
      %p123 = scmp.ne.s32.totalorder %s118, %s120
      %p124 = scmp.eq.s32.totalorder %s16, 0
      %p125 = por %p123, %p124
      %p126 = scmp.ne.s32.totalorder %s118, %s120
      %p127 = scmp.eq.s32.totalorder %s21, 2
      %p128 = por %p126, %p127
      %p129 = scmp.ne.s32.totalorder %s120, %s121
      %p130 = scmp.eq.s32.totalorder %s21, 0
      %p131 = por %p129, %p130
      %p132 = scmp.ne.s32.totalorder %s120, %s121
      %p133 = scmp.eq.s32.totalorder %s22, 2
      %p134 = por %p132, %p133
      %p136 = scmp.ne.s32.totalorder %s121, %s135
      %p137 = scmp.eq.s32.totalorder %s22, 0
      %p138 = por %p136, %p137
      %s140 = sadd.s32 %s139, 1
      %p143 = scmp.eq.s32.totalorder %s16, 2
      %p144 = scmp.ne.s32.totalorder %s139, %s141
      %p145 = scmp.eq.s32.totalorder %s16, 0
      %p146 = por %p144, %p145
      %p147 = scmp.ne.s32.totalorder %s139, %s141
      %p148 = scmp.eq.s32.totalorder %s21, 2
      %p149 = por %p147, %p148
      %p150 = scmp.ne.s32.totalorder %s141, %s142
      %p151 = scmp.eq.s32.totalorder %s21, 0
      %p152 = por %p150, %p151
      %p153 = scmp.ne.s32.totalorder %s141, %s142
      %p154 = scmp.eq.s32.totalorder %s22, 2
      %p155 = por %p153, %p154
      %p157 = scmp.ne.s32.totalorder %s142, %s156
      %p158 = scmp.eq.s32.totalorder %s22, 0
      %p159 = por %p157, %p158
      %s161 = sadd.s32 %s160, 1
      %p164 = scmp.eq.s32.totalorder %s16, 2
      %p165 = scmp.ne.s32.totalorder %s160, %s162
      %p166 = scmp.eq.s32.totalorder %s16, 0
      %p167 = por %p165, %p166
      %p168 = scmp.ne.s32.totalorder %s160, %s162
      %p169 = scmp.eq.s32.totalorder %s21, 2
      %p170 = por %p168, %p169
      %p171 = scmp.ne.s32.totalorder %s162, %s163
      %p172 = scmp.eq.s32.totalorder %s21, 0
      %p173 = por %p171, %p172
      %p174 = scmp.ne.s32.totalorder %s162, %s163
      %p175 = scmp.eq.s32.totalorder %s22, 2
      %p176 = por %p174, %p175
      %p178 = scmp.ne.s32.totalorder %s163, %s177
      %p179 = scmp.eq.s32.totalorder %s22, 0
      %p180 = por %p178, %p179
      %p181 = scmp.le.s32.totalorder 1, %s16
      %p182 = scmp.lt.s32.totalorder %s16, 4
      %p183 = pnand %p181, %p182
      %p184 = pneg %p183
      // Predicated region
      $region9: #{tpu_custom_call.1} parent=5 // pred_check
        _
      $region10: #{tpu_custom_call.1} parent=5 // pred_check_branch
        %186 = sbr.rel (%p183) target = $region12
      $region11: #{tpu_custom_call.1} parent=5 // pred_region
        %s187 = ssub.s32 %s16, 1
        // Predicated region
        $region13: #{tpu_custom_call.1} parent=11 // pred_check
          %p188 = pneg %p89
        $region14: #{tpu_custom_call.1} parent=11 // pred_check_branch
          %190 = sbr.rel (%p188) target = $region16
        $region15: #{tpu_custom_call.1} parent=11 // pred_region
          _
        $region16: #{tpu_custom_call.1} parent=11 // pred_fallthru
          _
        // Predicated region
        $region17: #{tpu_custom_call.1} parent=11 // pred_check
          %p191 = pneg %p110
        $region18: #{tpu_custom_call.1} parent=11 // pred_check_branch
          %193 = sbr.rel (%p191) target = $region20
        $region19: #{tpu_custom_call.1} parent=11 // pred_region
          _
        $region20: #{tpu_custom_call.1} parent=11 // pred_fallthru
          _
        // Predicated region
        $region21: #{tpu_custom_call.1} parent=11 // pred_check
          %p194 = pneg %p131
        $region22: #{tpu_custom_call.1} parent=11 // pred_check_branch
          %196 = sbr.rel (%p194) target = $region24
        $region23: #{tpu_custom_call.1} parent=11 // pred_region
          _
        $region24: #{tpu_custom_call.1} parent=11 // pred_fallthru
          _
        // Predicated region
        $region25: #{tpu_custom_call.1} parent=11 // pred_check
          %p197 = pneg %p152
        $region26: #{tpu_custom_call.1} parent=11 // pred_check_branch
          %199 = sbr.rel (%p197) target = $region28
        $region27: #{tpu_custom_call.1} parent=11 // pred_region
          _
        $region28: #{tpu_custom_call.1} parent=11 // pred_fallthru
          _
      $region12: #{tpu_custom_call.1} parent=5 // pred_fallthru
        _
      %p200 = scmp.lt.s32.totalorder %s16, 3
      // Predicated region
      $region29: #{tpu_custom_call.1} parent=5 // pred_check
        %p201 = pneg %p200
      $region30: #{tpu_custom_call.1} parent=5 // pred_check_branch
        %203 = sbr.rel (%p201) target = $region32
      $region31: #{tpu_custom_call.1} parent=5 // pred_region
        // Predicated region
        $region33: #{tpu_custom_call.1} parent=31 // pred_check
          %p204 = pneg %p36
        $region34: #{tpu_custom_call.1} parent=31 // pred_check_branch
          %206 = sbr.rel (%p204) target = $region36
        $region35: #{tpu_custom_call.1} parent=31 // pred_region
          %p207 = scmp.lt.s32.totalorder %s16, 2
          %s208 = scalar_select %p207, %s16, 2
          %s209 = scalar_lea.vmem %s0, %s208
        $region36: #{tpu_custom_call.1} parent=31 // pred_fallthru
          _
        // Predicated region
        $region37: #{tpu_custom_call.1} parent=31 // pred_check
          %p210 = pneg %p62
        $region38: #{tpu_custom_call.1} parent=31 // pred_check_branch
          %212 = sbr.rel (%p210) target = $region40
        $region39: #{tpu_custom_call.1} parent=31 // pred_region
          %s213 = sand.u32 %s52, 1
          %s214 = scalar_lea.sflag [#allocation3], %s213
          %s215 = sand.u32 %s52, 1
          %s216 = smul.addr %s215, 128
          %s217 = scalar_lea.vmem [#allocation2], %s216
          %s218 = smul.u32 16, %s16
          %s219 = ssub.s32 45, %s218
          %p220 = scmp.lt.s32.totalorder %s219, 16
          %s221 = scalar_select %p220, %s219, 16
          %s222 = smul.u32 128, %s221
          %s224 = ssub.s32 2048, %s222
          %225 = vsyncadd %s214, %s224
          %p226 = scmp.ne.s32.totalorder 0, %s222
          %s227 = smul.addr %s218, 128
          %s228 = scalar_lea.hbm %s1, %s227
          %s229 = smul.u32 8, %s221
          %s230 = sshll.u32 %s217, 4
          %s231 = int_to_ptr.vmem [resolvable:$true] %s230
          %s232 = sshll.u32 %s229, 4
          %236 = dma.hbm_to_vmem [thread:$0]  (%p226), %s228, %s232, %s231, %s214, 128, 128, 8
        $region40: #{tpu_custom_call.1} parent=31 // pred_fallthru
          _
      $region32: #{tpu_custom_call.1} parent=5 // pred_fallthru
        _
      %p237 = scmp.le.s32.totalorder 1, %s16
      %p238 = scmp.lt.s32.totalorder %s16, 4
      %p239 = pnand %p237, %p238
      %p240 = pneg %p239
      // Predicated region
      $region41: #{tpu_custom_call.1} parent=5 // pred_check
        _
      $region42: #{tpu_custom_call.1} parent=5 // pred_check_branch
        %242 = sbr.rel (%p239) target = $region44
      $region43: #{tpu_custom_call.1} parent=5 // pred_region
        %s243 = ssub.s32 %s16, 1
        %s244 = sand.u32 %s55, 1
        %s245 = scalar_lea.sflag [#allocation3], %s244
        %s246 = sand.u32 %s55, 1
        %s247 = smul.addr %s246, 128
        %s248 = scalar_lea.vmem [#allocation2], %s247
        // Predicated region
        $region45: #{tpu_custom_call.1} parent=43 // pred_check
          %p249 = pneg %p68
        $region46: #{tpu_custom_call.1} parent=43 // pred_check_branch
          %251 = sbr.rel (%p249) target = $region48
        $region47: #{tpu_custom_call.1} parent=43 // pred_region
          %252 = dma.done %s245, 2048
        $region48: #{tpu_custom_call.1} parent=43 // pred_fallthru
          _
        %p253 = scmp.lt.s32.totalorder %s21, 2
        %s254 = scalar_select %p253, %s21, 2
        %s255 = scalar_lea.vmem %s0, %s254
        %p256 = pneg %p42
        %p257 = pneg %p39
        %s258 = sand.u32 %s55, 1
        %s259 = scalar_lea.sflag [#allocation3], %s258
        %s260 = sand.u32 %s55, 1
        %s261 = smul.addr %s260, 128
        %s262 = scalar_lea.vmem [#allocation2], %s261
        %p263 = pneg %p68
        %p264 = pneg %p65
        %p265 = pneg %p89
        %p266 = pneg %p86
        %p267 = pneg %p110
        %p268 = pneg %p107
        %p269 = pneg %p131
        %p270 = pneg %p128
        %p271 = pneg %p152
        %p272 = pneg %p149
        %p273 = pneg %p173
        %p274 = pneg %p170
        %p275 = scmp.lt.s32.totalorder %s21, 2
        %s276 = scalar_select %p275, %s21, 2
        %s277 = scalar_lea.vmem %s0, %s276
        %s278 = smul.u32 16, %s21
        %s279 = ssub.s32 45, %s278
        %p280 = scmp.lt.s32.totalorder %s279, 16
        %s281 = scalar_select %p280, %s279, 16
        %s282 = smul.u32 128, %s281
        %p283 = scmp.eq.s32.totalorder %s21, 0
        // Predicated region
        $region49: #{tpu_custom_call.1} parent=43 // pred_check
          %p284 = pneg %p283
        $region50: #{tpu_custom_call.1} parent=43 // pred_check_branch
          %286 = sbr.rel (%p284) target = $region52
        $region51: #{tpu_custom_call.1} parent=43 // pred_region
          %287 = vst [vmem:[#allocation5] sm:$0xf] 0.0
        $region52: #{tpu_custom_call.1} parent=43 // pred_fallthru
          _
        %v288 = vld [vmem:[%s248] sm:$0xff]
        %v289 = vld [vmem:[%s248 + $0x8] sm:$0xff]
        %v290 = vld [vmem:[%s248 + $0x10] sm:$0xff]
        %v291 = vld [vmem:[%s248 + $0x18] sm:$0xff]
        %v292 = vld [vmem:[%s248 + $0x20] sm:$0xff]
        %v293 = vld [vmem:[%s248 + $0x28] sm:$0xff]
        %v294 = vld [vmem:[%s248 + $0x30] sm:$0xff]
        %v295 = vld [vmem:[%s248 + $0x38] sm:$0xff]
        %v296 = vld [vmem:[%s248 + $0x40] sm:$0xff]
        %v297 = vld [vmem:[%s248 + $0x48] sm:$0xff]
        %v298 = vld [vmem:[%s248 + $0x50] sm:$0xff]
        %v299 = vld [vmem:[%s248 + $0x58] sm:$0xff]
        %v300 = vld [vmem:[%s248 + $0x60] sm:$0xff]
        %v301 = vld [vmem:[%s248 + $0x68] sm:$0xff]
        %v302 = vld [vmem:[%s248 + $0x70] sm:$0xff]
        %v303 = vld [vmem:[%s248 + $0x78] sm:$0xff]
        %s304 = smul.u32 %s21, 128
        %v305 = vlaneseq
        %v306 = vshrl.u32 %v305, 7
        %v307 = vadd.s32 %v306, 8
        %v308 = vadd.s32 %v306, 16
        %v309 = vadd.s32 %v306, 24
        %v310 = vadd.s32 %v306, 32
        %v311 = vadd.s32 %v306, 40
        %v312 = vadd.s32 %v306, 48
        %v313 = vadd.s32 %v306, 56
        %v314 = vadd.s32 %v306, 64
        %v315 = vadd.s32 %v306, 72
        %v316 = vadd.s32 %v306, 80
        %v317 = vadd.s32 %v306, 88
        %v318 = vadd.s32 %v306, 96
        %v319 = vadd.s32 %v306, 104
        %v320 = vadd.s32 %v306, 112
        %v321 = vadd.s32 %v306, 120
        %v322 = vstv %s304
        %v323 = vadd.s32 %v322, %v306
        %v324 = vadd.s32 %v322, %v307
        %v325 = vadd.s32 %v322, %v308
        %v326 = vadd.s32 %v322, %v309
        %v327 = vadd.s32 %v322, %v310
        %v328 = vadd.s32 %v322, %v311
        %v329 = vadd.s32 %v322, %v312
        %v330 = vadd.s32 %v322, %v313
        %v331 = vadd.s32 %v322, %v314
        %v332 = vadd.s32 %v322, %v315
        %v333 = vadd.s32 %v322, %v316
        %v334 = vadd.s32 %v322, %v317
        %v335 = vadd.s32 %v322, %v318
        %v336 = vadd.s32 %v322, %v319
        %v337 = vadd.s32 %v322, %v320
        %v338 = vadd.s32 %v322, %v321
        %vm339 = vcmp.lt.s32.totalorder %v323, 360
        %vm340 = vcmp.lt.s32.totalorder %v324, 360
        %vm341 = vcmp.lt.s32.totalorder %v325, 360
        %vm342 = vcmp.lt.s32.totalorder %v326, 360
        %vm343 = vcmp.lt.s32.totalorder %v327, 360
        %vm344 = vcmp.lt.s32.totalorder %v328, 360
        %vm345 = vcmp.lt.s32.totalorder %v329, 360
        %vm346 = vcmp.lt.s32.totalorder %v330, 360
        %vm347 = vcmp.lt.s32.totalorder %v331, 360
        %vm348 = vcmp.lt.s32.totalorder %v332, 360
        %vm349 = vcmp.lt.s32.totalorder %v333, 360
        %vm350 = vcmp.lt.s32.totalorder %v334, 360
        %vm351 = vcmp.lt.s32.totalorder %v335, 360
        %vm352 = vcmp.lt.s32.totalorder %v336, 360
        %vm353 = vcmp.lt.s32.totalorder %v337, 360
        %vm354 = vcmp.lt.s32.totalorder %v338, 360
        %v355 = vsel %vm339, 1, 0
        %v356 = vsel %vm340, 1, 0
        %v357 = vsel %vm341, 1, 0
        %v358 = vsel %vm342, 1, 0
        %v359 = vsel %vm343, 1, 0
        %v360 = vsel %vm344, 1, 0
        %v361 = vsel %vm345, 1, 0
        %v362 = vsel %vm346, 1, 0
        %v363 = vsel %vm347, 1, 0
        %v364 = vsel %vm348, 1, 0
        %v365 = vsel %vm349, 1, 0
        %v366 = vsel %vm350, 1, 0
        %v367 = vsel %vm351, 1, 0
        %v368 = vsel %vm352, 1, 0
        %v369 = vsel %vm353, 1, 0
        %v370 = vsel %vm354, 1, 0
        %vm371 = vcmp.eq.s32.totalorder %v355, 1
        %vm372 = vcmp.eq.s32.totalorder %v356, 1
        %vm373 = vcmp.eq.s32.totalorder %v357, 1
        %vm374 = vcmp.eq.s32.totalorder %v358, 1
        %vm375 = vcmp.eq.s32.totalorder %v359, 1
        %vm376 = vcmp.eq.s32.totalorder %v360, 1
        %vm377 = vcmp.eq.s32.totalorder %v361, 1
        %vm378 = vcmp.eq.s32.totalorder %v362, 1
        %vm379 = vcmp.eq.s32.totalorder %v363, 1
        %vm380 = vcmp.eq.s32.totalorder %v364, 1
        %vm381 = vcmp.eq.s32.totalorder %v365, 1
        %vm382 = vcmp.eq.s32.totalorder %v366, 1
        %vm383 = vcmp.eq.s32.totalorder %v367, 1
        %vm384 = vcmp.eq.s32.totalorder %v368, 1
        %vm385 = vcmp.eq.s32.totalorder %v369, 1
        %vm386 = vcmp.eq.s32.totalorder %v370, 1
        %v387 = vsel %vm371, %v288, 0.0
        %v388 = vsel %vm372, %v289, 0.0
        %v389 = vsel %vm373, %v290, 0.0
        %v390 = vsel %vm374, %v291, 0.0
        %v391 = vsel %vm375, %v292, 0.0
        %v392 = vsel %vm376, %v293, 0.0
        %v393 = vsel %vm377, %v294, 0.0
        %v394 = vsel %vm378, %v295, 0.0
        %v395 = vsel %vm379, %v296, 0.0
        %v396 = vsel %vm380, %v297, 0.0
        %v397 = vsel %vm381, %v298, 0.0
        %v398 = vsel %vm382, %v299, 0.0
        %v399 = vsel %vm383, %v300, 0.0
        %v400 = vsel %vm384, %v301, 0.0
        %v401 = vsel %vm385, %v302, 0.0
        %v402 = vsel %vm386, %v303, 0.0
        %v403 = vld [vmem:[%s277] sm:$0x1]
        %v404 = vlaneseq
        %v405 = vshrl.u32 %v404, 7
        %v406 = vsub.s32 0, %v405
        %v407 = vrot.slane %v403, %v406
        %vm408 = vcmp.eq.s32.totalorder %v306, %v407
        %v409 = vsel %vm408, 1, 0
        %v410 = vcvt.s32.f32 %v409
        %v411 = vmul.f32 %v387, %v387
        %v412 = vmul.f32 %v388, %v388
        %v413 = vmul.f32 %v389, %v389
        %v414 = vmul.f32 %v390, %v390
        %v415 = vmul.f32 %v391, %v391
        %v416 = vmul.f32 %v392, %v392
        %v417 = vmul.f32 %v393, %v393
        %v418 = vmul.f32 %v394, %v394
        %v419 = vmul.f32 %v395, %v395
        %v420 = vmul.f32 %v396, %v396
        %v421 = vmul.f32 %v397, %v397
        %v422 = vmul.f32 %v398, %v398
        %v423 = vmul.f32 %v399, %v399
        %v424 = vmul.f32 %v400, %v400
        %v425 = vmul.f32 %v401, %v401
        %v426 = vmul.f32 %v402, %v402
        %v427 = vld [vmem:[#allocation5] sm:$0xf]
        %428 = vmatprep.subr.mxu0 %v411
        %429 = vmatpush1.msra.mxu0 %v387
        %430 = vmatprep.subr.mxu0 %v412
        %431 = vmatpush1.msra.mxu0 %v388
        %432 = vmatprep.subr.mxu0 %v413
        %433 = vmatpush1.msra.mxu0 %v389
        %434 = vmatprep.subr.mxu0 %v414
        %435 = vmatpush1.msra.mxu0 %v390
        %436 = vmatprep.subr.mxu0 %v415
        %437 = vmatpush1.msra.mxu0 %v391
        %438 = vmatprep.subr.mxu0 %v416
        %439 = vmatpush1.msra.mxu0 %v392
        %440 = vmatprep.subr.mxu0 %v417
        %441 = vmatpush1.msra.mxu0 %v393
        %442 = vmatprep.subr.mxu0 %v418
        %443 = vmatpush1.msra.mxu0 %v394
        %444 = vmatprep.subr.mxu0 %v419
        %445 = vmatpush1.msra.mxu0 %v395
        %446 = vmatprep.subr.mxu0 %v420
        %447 = vmatpush1.msra.mxu0 %v396
        %448 = vmatprep.subr.mxu0 %v421
        %449 = vmatpush1.msra.mxu0 %v397
        %450 = vmatprep.subr.mxu0 %v422
        %451 = vmatpush1.msra.mxu0 %v398
        %452 = vmatprep.subr.mxu0 %v423
        %453 = vmatpush1.msra.mxu0 %v399
        %454 = vmatprep.subr.mxu0 %v424
        %455 = vmatpush1.msra.mxu0 %v400
        %456 = vmatprep.subr.mxu0 %v425
        %457 = vmatpush1.msra.mxu0 %v401
        %458 = vmatprep.subr.mxu0 %v426
        %459 = vmatpush1.msra.mxu0 %v402
        %460 = vmatprep.subr.mxu0 0.0
        %461 = vmatpush1.msra.mxu0 0.0
        %462 = vmatprep.subr.mxu0 0.0
        %463 = vmatpush1.msra.mxu0 0.0
        %464 = vmatprep.subr.mxu0 0.0
        %465 = vmatpush1.msra.mxu0 0.0
        %466 = vmatprep.subr.mxu0 0.0
        %467 = vmatpush1.msra.mxu0 0.0
        %468 = vmatprep.subr.mxu0 0.0
        %469 = vmatpush1.msra.mxu0 0.0
        %470 = vmatprep.subr.mxu0 0.0
        %471 = vmatpush1.msra.mxu0 0.0
        %472 = vmatprep.subr.mxu0 0.0
        %473 = vmatpush1.msra.mxu0 0.0
        %474 = vmatprep.subr.mxu0 0.0
        %475 = vmatpush1.msra.mxu0 0.0
        %476 = vmatprep.subr.mxu0 0.0
        %477 = vmatpush1.msra.mxu0 0.0
        %478 = vmatprep.subr.mxu0 0.0
        %479 = vmatpush1.msra.mxu0 0.0
        %480 = vmatprep.subr.mxu0 0.0
        %481 = vmatpush1.msra.mxu0 0.0
        %482 = vmatprep.subr.mxu0 0.0
        %483 = vmatpush1.msra.mxu0 0.0
        %484 = vmatprep.subr.mxu0 0.0
        %485 = vmatpush1.msra.mxu0 0.0
        %486 = vmatprep.subr.mxu0 0.0
        %487 = vmatpush1.msra.mxu0 0.0
        %488 = vmatprep.subr.mxu0 0.0
        %489 = vmatpush1.msra.mxu0 0.0
        %490 = vmatprep.subr.mxu0 0.0
        %491 = vmatpush1.msra.mxu0 0.0
        %492 = vmatprep.mubr.f32.mxu0 0.0
        %493 = vmatmul.mubr.f32.gmra.mrb[0].mxu0 %v410
        %v494 = vpop.f32.mrb[0].mxu0
        %v495 = vadd.f32 0.0, %v494
        %v496 = vpop.f32.mrb[0].mxu0
        %v497 = vadd.f32 0.0, %v496
        %498 = vdwg.mxu0
        %v501 = vcombine.low %v495, %v497
        %v503 = vunpack.c.l.s4 1983009808
        %v504 = vunpack.c.0.s8 %v503
        %v505 = vlaneseq
        %v506 = vshrl.u32 %v505, 7
        %v507 = vsub.s32 %v504, %v506
        %v508 = vrot.slane %v501, %v507
        %v510 = vadd.f32 %v427, %v508
        %511 = vst [vmem:[#allocation5] sm:$0xf] %v510
        %p512 = scmp.eq.s32.totalorder %s21, 2
        // Predicated region
        $region53: #{tpu_custom_call.1} parent=43 // pred_check
          %p513 = pneg %p512
        $region54: #{tpu_custom_call.1} parent=43 // pred_check_branch
          %515 = sbr.rel (%p513) target = $region56
        $region55: #{tpu_custom_call.1} parent=43 // pred_region
          %v516 = vld [vmem:[%s5] sm:$0x3]
          %v517 = vld [vmem:[#allocation5] sm:$0xf]
          %519 = vset.pattern.permute.xlu0 0
          %520 = vperm.xlu0 %519, %v516
          %v521 = vpop.permute.xlu0 %520
          %v523 = vmul.f32 %v517, %v521
          %v525 = vrot.slane %v517, 2
          %v527 = vmul.f32 %v525, %v521
          %v528 = vld [vmem:[%s2] sm:$0x1]
          %v529 = vmul.f32 %v523, %v523
          %v531 = vlaneseq
          %v532 = vshrl.u32 %v531, 7
          %v533 = vsub.s32 0, %v532
          %v534 = vrot.slane %v528, %v533
          %v536 = vmul.f32 %v529, %v534
          %v537 = vsub.f32 2.0, %v528
          %v539 = vlaneseq
          %v540 = vshrl.u32 %v539, 7
          %v541 = vsub.s32 0, %v540
          %v542 = vrot.slane %v537, %v541
          %v544 = vmul.f32 %v536, %v542
          %v545 = vsub.f32 %v527, %v544
          %v546 = vadd.f32 %v545, 1e-06
          %v547 = vrsqrt.pop %v546
          %v548 = vld [vmem:[%s3] sm:$0x1]
          %v550 = vlaneseq
          %v551 = vshrl.u32 %v550, 7
          %v552 = vsub.s32 0, %v551
          %v553 = vrot.slane %v548, %v552
          %v555 = vmul.f32 %v553, %v547
          %v556 = vld [vmem:[%s4] sm:$0x1]
          %v557 = vmul.f32 %v523, %v534
          %v558 = vmul.f32 %v557, %v555
          %v560 = vlaneseq
          %v561 = vshrl.u32 %v560, 7
          %v562 = vsub.s32 0, %v561
          %v563 = vrot.slane %v556, %v562
          %v565 = vsub.f32 %v563, %v558
          %v568 = vcombine.low %v555, %v565
          %v570 = vunpack.c.l.s4 1983009808
          %v571 = vunpack.c.0.s8 %v570
          %v572 = vlaneseq
          %v573 = vshrl.u32 %v572, 7
          %v574 = vsub.s32 %v571, %v573
          %v575 = vrot.slane %v568, %v574
          %577 = vst [vmem:[#allocation5] sm:$0xf] %v575
        $region56: #{tpu_custom_call.1} parent=43 // pred_fallthru
          _
        // Predicated region
        $region57: #{tpu_custom_call.1} parent=43 // pred_check
          %p578 = pneg %p170
        $region58: #{tpu_custom_call.1} parent=43 // pred_check_branch
          %580 = sbr.rel (%p578) target = $region60
        $region59: #{tpu_custom_call.1} parent=43 // pred_region
          %s582 = ssub.s32 64, 64
          %583 = vsyncadd [#allocation4], %s582
          %s585 = sshll.u32 [#allocation5], 4
          %s586 = int_to_ptr.vmem [resolvable:$true] %s585
          %588 = dma.vmem_to_hbm [thread:$0]  %s586, 64, %s6, [#allocation4]
        $region60: #{tpu_custom_call.1} parent=43 // pred_fallthru
          _
        // Predicated region
        $region61: #{tpu_custom_call.1} parent=43 // pred_check
          %p589 = pneg %p170
        $region62: #{tpu_custom_call.1} parent=43 // pred_check_branch
          %591 = sbr.rel (%p589) target = $region64
        $region63: #{tpu_custom_call.1} parent=43 // pred_region
          %592 = dma.done [#allocation4], 64
        $region64: #{tpu_custom_call.1} parent=43 // pred_fallthru
          _
      $region44: #{tpu_custom_call.1} parent=5 // pred_fallthru
        _
      %p593 = scmp.le.s32.totalorder 2, %s16
      // Predicated region
      $region65: #{tpu_custom_call.1} parent=5 // pred_check
        %p594 = pneg %p593
      $region66: #{tpu_custom_call.1} parent=5 // pred_check_branch
        %596 = sbr.rel (%p594) target = $region68
      $region67: #{tpu_custom_call.1} parent=5 // pred_region
        %s597 = ssub.s32 %s16, 2
      $region68: #{tpu_custom_call.1} parent=5 // pred_fallthru
        _
    $region6: #{tpu_custom_call.1} parent=1 // loop_footer
      %s20 = sadd.s32 1, %s16
    $region7: #{tpu_custom_call.1} parent=1 // loop_footer_branch
      %15 = sbr.rel target = $region3
    $region8: #{tpu_custom_call.1} parent=1 // loop_exit
      _
    %598 = vsyncpa [#allocation3], 1
    %s599 = scalar_lea.sflag [#allocation3], 1
    %600 = vsyncpa %s599, 1
    %601 = vsyncpa [#allocation4], 1
    %s602 = scalar_lea.sflag [#allocation4], 1
    %603 = vsyncpa %s602, 1

</llo_original>
